<compile_context>
chip_gen: v6e
topology: v6e:2x2x1
jax: 0.10.0
libtpu: 0.0.40
codegen_flags: <defaults>
</compile_context>

<pallas_src>
import functools

import jax
import jax.numpy as jnp
from jax.experimental import pallas as pl
from jax.experimental.pallas import tpu as pltpu


def _ln2d_kernel(x_ref, w_ref, b_ref, o_ref, *, eps, inv_c):
    # x_ref/o_ref: (b_tile, C, hw_tile) -- channels on sublanes, spatial on lanes
    # w_ref/b_ref: (1, C, 1)
    x = x_ref[...].astype(jnp.float32)                       # (b_tile, C, hw_tile)
    u = jnp.sum(x, axis=1, keepdims=True) * inv_c            # mean over channels
    d = x - u
    s = jnp.sum(d * d, axis=1, keepdims=True) * inv_c        # biased variance
    inv = jax.lax.rsqrt(s + eps)                             # EUP rsqrt (no divide)
    w = w_ref[...].astype(jnp.float32)                       # (1, C, 1)
    b = b_ref[...].astype(jnp.float32)
    o_ref[...] = ((d * inv) * w + b).astype(o_ref.dtype)


def ln2d(x, weight, bias, eps=1e-6, max_block_bytes=8 << 20):
    """x: (B, C, H, W) NCHW array. weight/bias: (C,)."""
    B, C, H, W = x.shape
    HW = H * W
    dtype_bytes = jnp.dtype(x.dtype).itemsize

    # --- VMEM budget (per generation) --------------------------------------
    try:
        phys_vmem = int(pltpu.get_tpu_info().vmem_capacity_bytes)
    except Exception:
        phys_vmem = 64 << 20                  # v7x per-TC worst case
    vmem_cap = int(min(48 << 20, (phys_vmem * 3) // 4))
    reserve = 2 << 20                         # compiler scratch, w/b blocks, misc

    # Per-element VMEM cost of one block: double-buffered input + output in the
    # native dtype, plus ~4 f32-sized temporaries (x, d, products).
    per_elem_cost = 4 * dtype_bytes + 4 * 4
    feasible_elems = max(128, (vmem_cap - reserve) // per_elem_cost)
    target_elems = max(128, min(feasible_elems, max_block_bytes // dtype_bytes))

    # --- tile shapes --------------------------------------------------------
    hw_full = pl.cdiv(HW, 128) * 128          # lane-rounded spatial extent
    cols_budget = max(1, target_elems // C)   # lane columns (per-image positions)
    # Note: for very large C the 128-lane floor can exceed the byte budget; the
    # vmem_limit below still scales with the actual block size.
    hw_tile = min(hw_full, max(128, (cols_budget // 128) * 128))
    n_hw = pl.cdiv(HW, hw_tile)

    # Small feature maps: pack several images per block (statistics are
    # independent per (b, spatial) column, so this is free correctness-wise).
    if n_hw == 1:
        b_tile = max(1, min(B, cols_budget // hw_tile))
    else:
        b_tile = 1
    n_b = pl.cdiv(B, b_tile)

    blk_elems = b_tile * C * hw_tile
    vmem_limit = int(min(vmem_cap, max(32 << 20, blk_elems * per_elem_cost + reserve)))

    # Free reshape: NCHW keeps H*W contiguous in the last dims.  No pad/slice:
    # the ragged last blocks are handled by masked edge writes in the pipeline.
    x3 = x.reshape(B, C, HW)
    w3 = weight.reshape(1, C, 1)
    b3 = bias.reshape(1, C, 1)

    kernel = functools.partial(_ln2d_kernel, eps=float(eps), inv_c=1.0 / C)

    y3 = pl.pallas_call(
        kernel,
        out_shape=jax.ShapeDtypeStruct((B, C, HW), x.dtype),
        grid_spec=pltpu.PrefetchScalarGridSpec(
            num_scalar_prefetch=0,
            grid=(n_b, n_hw),
            in_specs=[
                pl.BlockSpec((b_tile, C, hw_tile), lambda i, j: (i, 0, j)),
                pl.BlockSpec((1, C, 1), lambda i, j: (0, 0, 0)),
                pl.BlockSpec((1, C, 1), lambda i, j: (0, 0, 0)),
            ],
            out_specs=pl.BlockSpec((b_tile, C, hw_tile), lambda i, j: (i, 0, j)),
        ),
        compiler_params=pltpu.CompilerParams(
            # Both axes independent; "parallel" lets v7x shard the grid across
            # its two TensorCores (no-op on single-TC v5e/v6e).
            dimension_semantics=("parallel", "parallel"),
            vmem_limit_bytes=vmem_limit,
        ),
    )(x3, w3, b3)

    return y3.reshape(B, C, H, W)


def ln2d_reference(x, weight, bias, eps=1e-6):
    u = jnp.mean(x, axis=1, keepdims=True)
    s = jnp.mean((x - u) ** 2, axis=1, keepdims=True)
    y = (x - u) / jnp.sqrt(s + eps)
    return weight[None, :, None, None] * y + bias[None, :, None, None]


if __name__ == "__main__":
    key = jax.random.PRNGKey(0)

    # Primary case: LayerNorm2d(num_channels=4) on a (2, 4, 16, 16) feature map.
    B, C, H, W = 2, 4, 16, 16
    x = jax.random.normal(key, (B, C, H, W), dtype=jnp.float32)
    weight = jnp.ones((C,), dtype=jnp.float32)   # nn.Parameter(torch.ones(C))
    bias = jnp.zeros((C,), dtype=jnp.float32)    # nn.Parameter(torch.zeros(C))

    out = jax.block_until_ready(ln2d(x, weight, bias, eps=1e-6))
    ref = ln2d_reference(x, weight, bias, eps=1e-6)
    assert out.shape == (B, C, H, W)
    assert jnp.allclose(out, ref, atol=1e-5, rtol=1e-5)

    # Ragged-edge case: HW not a multiple of the lane tile, small forced tile.
    # Exercises the masked edge blocks (no host-side pad/slice) and a
    # non-trivial affine transform.
    B2, C2, H2, W2 = 3, 5, 16, 20
    k1, k2, k3 = jax.random.split(jax.random.PRNGKey(1), 3)
    x2 = jax.random.normal(k1, (B2, C2, H2, W2), dtype=jnp.float32)
    w2 = jax.random.normal(k2, (C2,), dtype=jnp.float32)
    b2 = jax.random.normal(k3, (C2,), dtype=jnp.float32)
    out2 = jax.block_until_ready(ln2d(x2, w2, b2, eps=1e-6, max_block_bytes=4096))
    ref2 = ln2d_reference(x2, w2, b2, eps=1e-6)
    assert jnp.allclose(out2, ref2, atol=1e-5, rtol=1e-5)

    print("KERNEL_OK")
</pallas_src>

<mosaic_0001>
module attributes {stable_mosaic.version = 11 : i64} {
  func.func @_ln2d_kernel(%arg0: i32, %arg1: i32, %arg2: memref<2x4x256xf32, #tpu.memory_space<vmem>>, %arg3: memref<1x4x1xf32, #tpu.memory_space<vmem>>, %arg4: memref<1x4x1xf32, #tpu.memory_space<vmem>>, %arg5: memref<2x4x256xf32, #tpu.memory_space<vmem>>) attributes {dimension_semantics = [#tpu.dimension_semantics<parallel>, #tpu.dimension_semantics<parallel>], iteration_bounds = array<i64: 1, 1>, scalar_prefetch = 0 : i64, scratch_operands = 0 : i64, tpu.core_type = #tpu.core_type<tc>, window_params = [{transform_indices = @transform_0, window_bounds = array<i64: 2, 4, 256>}, {pipeline_mode = #tpu.pipeline_mode<synchronous>, transform_indices = @transform_1, window_bounds = array<i64: 1, 4, 1>}, {pipeline_mode = #tpu.pipeline_mode<synchronous>, transform_indices = @transform_2, window_bounds = array<i64: 1, 4, 1>}, {transform_indices = @transform_3, window_bounds = array<i64: 2, 4, 256>}]} {
    %c0 = arith.constant 0 : index
    %c0_0 = arith.constant 0 : index
    %c0_1 = arith.constant 0 : index
    %0 = vector.load %arg2[%c0, %c0_0, %c0_1] : memref<2x4x256xf32, #tpu.memory_space<vmem>>, vector<2x4x256xf32>
    %cst = arith.constant dense<0.000000e+00> : vector<2x256xf32>
    %1 = vector.multi_reduction <add>, %0, %cst [1] : vector<2x4x256xf32> to vector<2x256xf32>
    %2 = vector.shape_cast %1 : vector<2x256xf32> to vector<2x1x256xf32>
    %cst_2 = arith.constant 2.500000e-01 : f32
    %3 = vector.broadcast %cst_2 : f32 to vector<2x1x256xf32>
    %4 = arith.mulf %2, %3 : vector<2x1x256xf32>
    %5 = vector.broadcast %4 : vector<2x1x256xf32> to vector<2x4x256xf32>
    %6 = arith.subf %0, %5 : vector<2x4x256xf32>
    %7 = arith.mulf %6, %6 : vector<2x4x256xf32>
    %cst_3 = arith.constant dense<0.000000e+00> : vector<2x256xf32>
    %8 = vector.multi_reduction <add>, %7, %cst_3 [1] : vector<2x4x256xf32> to vector<2x256xf32>
    %9 = vector.shape_cast %8 : vector<2x256xf32> to vector<2x1x256xf32>
    %cst_4 = arith.constant 2.500000e-01 : f32
    %10 = vector.broadcast %cst_4 : f32 to vector<2x1x256xf32>
    %11 = arith.mulf %9, %10 : vector<2x1x256xf32>
    %cst_5 = arith.constant 9.99999997E-7 : f32
    %12 = vector.broadcast %cst_5 : f32 to vector<2x1x256xf32>
    %13 = arith.addf %11, %12 : vector<2x1x256xf32>
    %14 = math.rsqrt %13 : vector<2x1x256xf32>
    %c0_6 = arith.constant 0 : index
    %c0_7 = arith.constant 0 : index
    %c0_8 = arith.constant 0 : index
    %15 = vector.load %arg3[%c0_6, %c0_7, %c0_8] : memref<1x4x1xf32, #tpu.memory_space<vmem>>, vector<1x4x1xf32>
    %c0_9 = arith.constant 0 : index
    %c0_10 = arith.constant 0 : index
    %c0_11 = arith.constant 0 : index
    %16 = vector.load %arg4[%c0_9, %c0_10, %c0_11] : memref<1x4x1xf32, #tpu.memory_space<vmem>>, vector<1x4x1xf32>
    %17 = vector.broadcast %14 : vector<2x1x256xf32> to vector<2x4x256xf32>
    %18 = arith.mulf %6, %17 : vector<2x4x256xf32>
    %19 = vector.broadcast %15 : vector<1x4x1xf32> to vector<2x4x256xf32>
    %20 = arith.mulf %18, %19 : vector<2x4x256xf32>
    %21 = vector.broadcast %16 : vector<1x4x1xf32> to vector<2x4x256xf32>
    %22 = arith.addf %20, %21 : vector<2x4x256xf32>
    %c0_12 = arith.constant 0 : index
    %c0_13 = arith.constant 0 : index
    %c0_14 = arith.constant 0 : index
    %23 = vector.load %arg5[%c0_12, %c0_13, %c0_14] : memref<2x4x256xf32, #tpu.memory_space<vmem>>, vector<2x4x256xf32>
    tpu.vector_store %arg5[%c0_12, %c0_13, %c0_14], %22 {strides = array<i32>} : memref<2x4x256xf32, #tpu.memory_space<vmem>>, vector<2x4x256xf32>,
    return
  }
  func.func @transform_0(%arg0: i32, %arg1: i32) -> (i32, i32, i32) {
    %c0_i32 = arith.constant 0 : i32
    %c0_i32_0 = arith.constant 0 : i32
    return %arg0, %c0_i32, %arg1 : i32, i32, i32
  }
  func.func @transform_1(%arg0: i32, %arg1: i32) -> (i32, i32, i32) {
    %c0_i32 = arith.constant 0 : i32
    %c0_i32_0 = arith.constant 0 : i32
    %c0_i32_1 = arith.constant 0 : i32
    %c0_i32_2 = arith.constant 0 : i32
    return %c0_i32, %c0_i32_0, %c0_i32_1 : i32, i32, i32
  }
  func.func @transform_2(%arg0: i32, %arg1: i32) -> (i32, i32, i32) {
    %c0_i32 = arith.constant 0 : i32
    %c0_i32_0 = arith.constant 0 : i32
    %c0_i32_1 = arith.constant 0 : i32
    %c0_i32_2 = arith.constant 0 : i32
    return %c0_i32, %c0_i32_0, %c0_i32_1 : i32, i32, i32
  }
  func.func @transform_3(%arg0: i32, %arg1: i32) -> (i32, i32, i32) {
    %c0_i32 = arith.constant 0 : i32
    %c0_i32_0 = arith.constant 0 : i32
    return %arg0, %c0_i32, %arg1 : i32, i32, i32
  }
}

</mosaic_0001>

<llo_original>
// kernel: tpu_custom_call.1
$region0: #{tpu_custom_call.1}
  #allocation0 [shape = 'u32[]', space=smem, size = 0x4, offset = 0x4, fixed_abs, tag = 'smem constant byte address 0x4 - core index']
  #allocation1 [shape = 'u32[144,128]{1,0:T(1,128)}', space=vmem, size = 0x12000, scoped, tag = 'internal scratch']
  %s0 = inlined_call_operand.hbm [shape: f32[2,4,256], index: 0, kind: input, shape index: {}]
  %s1 = inlined_call_operand.vmem [shape: f32[1,4,1], index: 1, kind: input, shape index: {}]
  %s2 = inlined_call_operand.vmem [shape: f32[1,4,1], index: 2, kind: input, shape index: {}]
  %s3 = inlined_call_operand.hbm [shape: f32[2,4,256], index: 3, kind: output, shape index: {}]
  %s4 = sld [smem:[#allocation0]]
  $region26: #{tpu_custom_call.1} parent=0
    _
  %s6 = ssub.s32 1, %s4
  %s7 = scalar_select 0, %s6, %s4
  $region1: #{tpu_custom_call.1} parent=0
    #allocation2 [shape = 'u8[8192]{0}', space=vmem, size = 0x2000, scoped, tag = 'input window, operand 0, single buffered']
    #allocation3 [shape = 's32[1]{0}', space=sflag, size = 0x4, scoped, tag = 'scoped memory for tpu_custom_call.1']
    #allocation4 [shape = 's32[1]{0}', space=sflag, size = 0x4, scoped, tag = 'scoped memory for tpu_custom_call.1']
    #allocation5 [shape = 'u8[8192]{0}', space=vmem, size = 0x2000, scoped, tag = 'output window, operand 0, single buffered']
    %8 = vsyncpa [#allocation3], 0
    %9 = vsyncpa [#allocation4], 0
    // Predicated region
    $region2: #{tpu_custom_call.1} parent=1 // pred_check
      _
    $region3: #{tpu_custom_call.1} parent=1 // pred_check_branch
      %11 = sbr.rel (0) target = $region5
    $region4: #{tpu_custom_call.1} parent=1 // pred_region
      %s13 = ssub.s32 256, 256
      %14 = vsyncadd [#allocation3], %s13
      %s15 = sshll.u32 [#allocation2], 4
      %s16 = int_to_ptr.vmem [resolvable:$true] %s15
      %21 = dma.hbm_to_vmem [thread:$0]  %s0, 256, %s16, [#allocation3], 128, 128, 8
    $region5: #{tpu_custom_call.1} parent=1 // pred_fallthru
      _
    // Predicated region
    $region6: #{tpu_custom_call.1} parent=1 // pred_check
      _
    $region7: #{tpu_custom_call.1} parent=1 // pred_check_branch
      %23 = sbr.rel (0) target = $region9
    $region8: #{tpu_custom_call.1} parent=1 // pred_region
      _
    $region9: #{tpu_custom_call.1} parent=1 // pred_fallthru
      _
    // Predicated region
    $region10: #{tpu_custom_call.1} parent=1 // pred_check
      _
    $region11: #{tpu_custom_call.1} parent=1 // pred_check_branch
      %25 = sbr.rel (0) target = $region13
    $region12: #{tpu_custom_call.1} parent=1 // pred_region
      _
    $region13: #{tpu_custom_call.1} parent=1 // pred_fallthru
      _
    // Predicated region
    $region14: #{tpu_custom_call.1} parent=1 // pred_check
      _
    $region15: #{tpu_custom_call.1} parent=1 // pred_check_branch
      %27 = sbr.rel (0) target = $region17
    $region16: #{tpu_custom_call.1} parent=1 // pred_region
      %28 = dma.done [#allocation3], 256
    $region17: #{tpu_custom_call.1} parent=1 // pred_fallthru
      _
    %v29 = vld [vmem:[#allocation2] sm:$0xff]
    %v30 = vld [vmem:[#allocation2 + $0x8] sm:$0xff]
    %v33 = vcombine.high %v29, %v29
    %v34 = vcombine.high %v30, %v30
    %vm37 = vcmask 1043456
    %v38 = vsel %vm37, %v29, 0.0
    %v39 = vrot.slane %v38, 4
    %v40 = vadd.f32 %v38, %v39
    %v41 = vrot.slane %v40, 2
    %v42 = vadd.f32 %v40, %v41
    %v43 = vrot.slane %v42, 1
    %v44 = vadd.f32 %v42, %v43
    %v45 = vsel %vm37, %v33, 0.0
    %v46 = vrot.slane %v45, 4
    %v47 = vadd.f32 %v45, %v46
    %v48 = vrot.slane %v47, 2
    %v49 = vadd.f32 %v47, %v48
    %v50 = vrot.slane %v49, 1
    %v51 = vadd.f32 %v49, %v50
    %v52 = vsel %vm37, %v30, 0.0
    %v53 = vrot.slane %v52, 4
    %v54 = vadd.f32 %v52, %v53
    %v55 = vrot.slane %v54, 2
    %v56 = vadd.f32 %v54, %v55
    %v57 = vrot.slane %v56, 1
    %v58 = vadd.f32 %v56, %v57
    %v59 = vsel %vm37, %v34, 0.0
    %v60 = vrot.slane %v59, 4
    %v61 = vadd.f32 %v59, %v60
    %v62 = vrot.slane %v61, 2
    %v63 = vadd.f32 %v61, %v62
    %v64 = vrot.slane %v63, 1
    %v65 = vadd.f32 %v63, %v64
    %v66 = vmul.f32 %v44, 0.25
    %v67 = vmul.f32 %v51, 0.25
    %v68 = vmul.f32 %v58, 0.25
    %v69 = vmul.f32 %v65, 0.25
    %v74 = vcombine.low %v66, %v67
    %v75 = vcombine.low %v68, %v69
    %v78 = vsub.f32 %v29, %v74
    %v79 = vsub.f32 %v30, %v75
    %v80 = vmul.f32 %v78, %v78
    %v81 = vmul.f32 %v79, %v79
    %v84 = vcombine.high %v80, %v80
    %v85 = vcombine.high %v81, %v81
    %v88 = vsel %vm37, %v80, 0.0
    %v89 = vrot.slane %v88, 4
    %v90 = vadd.f32 %v88, %v89
    %v91 = vrot.slane %v90, 2
    %v92 = vadd.f32 %v90, %v91
    %v93 = vrot.slane %v92, 1
    %v94 = vadd.f32 %v92, %v93
    %v95 = vsel %vm37, %v84, 0.0
    %v96 = vrot.slane %v95, 4
    %v97 = vadd.f32 %v95, %v96
    %v98 = vrot.slane %v97, 2
    %v99 = vadd.f32 %v97, %v98
    %v100 = vrot.slane %v99, 1
    %v101 = vadd.f32 %v99, %v100
    %v102 = vsel %vm37, %v81, 0.0
    %v103 = vrot.slane %v102, 4
    %v104 = vadd.f32 %v102, %v103
    %v105 = vrot.slane %v104, 2
    %v106 = vadd.f32 %v104, %v105
    %v107 = vrot.slane %v106, 1
    %v108 = vadd.f32 %v106, %v107
    %v109 = vsel %vm37, %v85, 0.0
    %v110 = vrot.slane %v109, 4
    %v111 = vadd.f32 %v109, %v110
    %v112 = vrot.slane %v111, 2
    %v113 = vadd.f32 %v111, %v112
    %v114 = vrot.slane %v113, 1
    %v115 = vadd.f32 %v113, %v114
    %v116 = vmul.f32 %v94, 0.25
    %v117 = vmul.f32 %v101, 0.25
    %v118 = vmul.f32 %v108, 0.25
    %v119 = vmul.f32 %v115, 0.25
    %v120 = vadd.f32 %v116, 1e-06
    %v121 = vadd.f32 %v117, 1e-06
    %v122 = vadd.f32 %v118, 1e-06
    %v123 = vadd.f32 %v119, 1e-06
    %v124 = vrsqrt.pop %v120
    %v125 = vrsqrt.pop %v121
    %v126 = vrsqrt.pop %v122
    %v127 = vrsqrt.pop %v123
    %v128 = vld [vmem:[%s1] sm:$0xf]
    %v129 = vld [vmem:[%s2] sm:$0xf]
    %v134 = vcombine.low %v124, %v125
    %v135 = vcombine.low %v126, %v127
    %v138 = vmul.f32 %v78, %v134
    %v139 = vmul.f32 %v79, %v135
    %141 = vset.pattern.permute.xlu0 0
    %142 = vperm.xlu0 %141, %v128
    %v143 = vpop.permute.xlu0 %142
    %v145 = vunpack.c.l.s4 839922192
    %v146 = vunpack.c.0.s8 %v145
    %v147 = vlaneseq
    %v148 = vshrl.u32 %v147, 7
    %v149 = vsub.s32 %v146, %v148
    %v150 = vrot.slane %v143, %v149
    %v152 = vmul.f32 %v138, %v150
    %v153 = vmul.f32 %v139, %v150
    %155 = vset.pattern.permute.xlu0 0
    %156 = vperm.xlu0 %155, %v129
    %v157 = vpop.permute.xlu0 %156
    %v159 = vunpack.c.l.s4 839922192
    %v160 = vunpack.c.0.s8 %v159
    %v161 = vlaneseq
    %v162 = vshrl.u32 %v161, 7
    %v163 = vsub.s32 %v160, %v162
    %v164 = vrot.slane %v157, %v163
    %v166 = vadd.f32 %v152, %v164
    %v167 = vadd.f32 %v153, %v164
    %168 = vst [vmem:[#allocation5] sm:$0xff] %v166
    %169 = vst [vmem:[#allocation5 + $0x8] sm:$0xff] %v167
    // Predicated region
    $region18: #{tpu_custom_call.1} parent=1 // pred_check
      _
    $region19: #{tpu_custom_call.1} parent=1 // pred_check_branch
      %171 = sbr.rel (0) target = $region21
    $region20: #{tpu_custom_call.1} parent=1 // pred_region
      %s173 = ssub.s32 256, 256
      %174 = vsyncadd [#allocation4], %s173
      %s175 = sshll.u32 [#allocation5], 4
      %s176 = int_to_ptr.vmem [resolvable:$true] %s175
      %181 = dma.vmem_to_hbm [thread:$0]  %s176, 256, %s3, [#allocation4], 128, 128, 8
    $region21: #{tpu_custom_call.1} parent=1 // pred_fallthru
      _
    // Predicated region
    $region22: #{tpu_custom_call.1} parent=1 // pred_check
      _
    $region23: #{tpu_custom_call.1} parent=1 // pred_check_branch
      %183 = sbr.rel (0) target = $region25
    $region24: #{tpu_custom_call.1} parent=1 // pred_region
      %184 = dma.done [#allocation4], 256
    $region25: #{tpu_custom_call.1} parent=1 // pred_fallthru
      _
    %185 = vsyncpa [#allocation3], 1
    %186 = vsyncpa [#allocation4], 1

</llo_original>
